<compile_context>
chip_gen: v5e
topology: v5e:2x2
jax: 0.10.0
libtpu: 0.0.40
codegen_flags: <defaults>
</compile_context>

<pallas_src>
import jax
import jax.numpy as jnp
from jax.experimental import pallas as pl
from jax.experimental.pallas import tpu as pltpu

STATE_DIM = 11     # Hopper-v2
ACTION_DIM = 3     # Hopper-v2
H1 = 400
H2 = 300

# Lane-aligned (multiple-of-128) padded feature dims (state dim left unpadded).
H1P = 512          # padded hidden 1
H2P = 384          # padded hidden 2
AP = 128           # padded action dim (lane-dense output -> unmasked vst)

MAX_BATCH_TILE = 512


def _cdiv(a, b):
    return -(-a // b)


def _round_up(n, m):
    return _cdiv(n, m) * m


def _pad2(a, rows, cols):
    r, c = a.shape
    return jnp.pad(a, ((0, rows - r), (0, cols - c)))


def _batch_tiling(batch):
    """Balanced batch tiling: minimal pad waste, even #tiles for v7x's 2 TCs."""
    num_tiles = _cdiv(batch, MAX_BATCH_TILE)
    # v7x has 2 TensorCores; with a single grid step the "parallel" axis does nothing.
    # Force an even number of tiles when there is enough work (no-op cost on v5e/v6e).
    if batch >= 16 and num_tiles % 2 == 1:
        num_tiles += 1
    tb = _round_up(_cdiv(batch, num_tiles), 8)   # sublane-aligned tile
    bp = num_tiles * tb
    return num_tiles, tb, bp


def td3_actor_kernel(x_ref, w1_ref, b1_ref, w2_ref, b2_ref, w3_ref, b3_ref, o_ref):
    # One batch tile per grid step; weights are VMEM-resident (constant block index).
    # bf16 MXU operands, f32 accumulation; bias/ReLU/tanh in f32.
    x = x_ref[...].astype(jnp.bfloat16)
    h1 = jnp.dot(x, w1_ref[...], preferred_element_type=jnp.float32) + b1_ref[...]
    h1 = jnp.maximum(h1, 0.0)                                    # ReLU
    h2 = jnp.dot(h1.astype(jnp.bfloat16), w2_ref[...],
                 preferred_element_type=jnp.float32) + b2_ref[...]
    h2 = jnp.maximum(h2, 0.0)                                    # ReLU
    out = jnp.dot(h2.astype(jnp.bfloat16), w3_ref[...],
                  preferred_element_type=jnp.float32) + b3_ref[...]
    o_ref[...] = jnp.tanh(out)                                   # tanh


def prepare_params(params):
    """One-time padding + bf16 weight cast. Call once at param load, NOT per forward."""
    w1, b1, w2, b2, w3, b3 = params
    w1p = _pad2(w1, STATE_DIM, H1P).astype(jnp.bfloat16)   # K stays 11 (unpadded)
    w2p = _pad2(w2, H1P, H2P).astype(jnp.bfloat16)
    w3p = _pad2(w3, H2P, AP).astype(jnp.bfloat16)
    b1p = _pad2(b1, 1, H1P)                                # biases stay f32
    b2p = _pad2(b2, 1, H2P)
    b3p = _pad2(b3, 1, AP)
    return w1p, b1p, w2p, b2p, w3p, b3p


@jax.jit
def td3_actor_forward(x, prepared_params):
    w1p, b1p, w2p, b2p, w3p, b3p = prepared_params
    batch = x.shape[0]
    num_tiles, tb, bp = _batch_tiling(batch)

    # Only the batch (sublane) dim of x is padded; state dim stays 11.
    xp = jnp.pad(x.astype(jnp.float32), ((0, bp - batch), (0, 0)))

    x_spec = pl.BlockSpec((tb, STATE_DIM), lambda i: (i, 0))
    o_spec = pl.BlockSpec((tb, AP), lambda i: (i, 0))

    def const_spec(shape):
        # Same block index every grid step -> weights/biases stay resident in VMEM.
        return pl.BlockSpec(shape, lambda i: (0, 0))

    cost = pl.CostEstimate(
        flops=2 * bp * (STATE_DIM * H1P + H1P * H2P + H2P * AP),
        transcendentals=bp * AP,
        bytes_accessed=(4 * bp * STATE_DIM                    # x (f32, unpadded lanes)
                        + 4 * bp * AP                         # out (f32)
                        + 2 * (STATE_DIM * H1P + H1P * H2P + H2P * AP)  # bf16 weights
                        + 4 * (H1P + H2P + AP)),              # f32 biases
    )

    out_p = pl.pallas_call(
        td3_actor_kernel,
        out_shape=jax.ShapeDtypeStruct((bp, AP), jnp.float32),
        grid=(num_tiles,),
        in_specs=[
            x_spec,
            const_spec((STATE_DIM, H1P)), const_spec((1, H1P)),
            const_spec((H1P, H2P)), const_spec((1, H2P)),
            const_spec((H2P, AP)), const_spec((1, AP)),
        ],
        out_specs=o_spec,
        compiler_params=pltpu.CompilerParams(
            dimension_semantics=("parallel",),   # shard batch tiles across TCs (v7x)
        ),
        cost_estimate=cost,
    )(xp, w1p, b1p, w2p, b2p, w3p, b3p)

    # Strip batch and lane padding.
    return out_p[:batch, :ACTION_DIM]


def init_params(key):
    """Deterministic init mimicking PyTorch nn.Linear default (uniform +/- 1/sqrt(fan_in)).

    Weights stored (in_features, out_features) so x @ W + b == PyTorch x @ W.T + b.
    """
    def linear(key, fan_in, fan_out):
        kw, kb = jax.random.split(key)
        bound = 1.0 / jnp.sqrt(jnp.float32(fan_in))
        w = jax.random.uniform(kw, (fan_in, fan_out), jnp.float32, -bound, bound)
        b = jax.random.uniform(kb, (1, fan_out), jnp.float32, -bound, bound)
        return w, b

    k1, k2, k3 = jax.random.split(key, 3)
    w1, b1 = linear(k1, STATE_DIM, H1)
    w2, b2 = linear(k2, H1, H2)
    w3, b3 = linear(k3, H2, ACTION_DIM)
    return w1, b1, w2, b2, w3, b3


def reference_forward(x, params):
    w1, b1, w2, b2, w3, b3 = params
    h1 = jnp.maximum(x @ w1 + b1, 0.0)
    h2 = jnp.maximum(h1 @ w2 + b2, 0.0)
    return jnp.tanh(h2 @ w3 + b3)


if __name__ == "__main__":
    key = jax.random.PRNGKey(0)
    kp, kx = jax.random.split(key)
    params = init_params(kp)
    prepared = prepare_params(params)   # pad + bf16-cast ONCE

    # Small batch (spec-sized) check: 1 tile of 8 rows.
    batch = 2
    x = jax.random.normal(kx, (batch, STATE_DIM), jnp.float32)
    out = jax.block_until_ready(td3_actor_forward(x, prepared))
    ref = reference_forward(x, params)
    assert out.shape == (batch, ACTION_DIM)
    assert jnp.allclose(out, ref, atol=2e-2, rtol=2e-2), "mismatch vs. reference (batch=2)"

    # Larger ragged batch exercising the balanced batch grid (300 -> 2 tiles of 152).
    xb = jax.random.normal(kx, (300, STATE_DIM), jnp.float32)
    outb = jax.block_until_ready(td3_actor_forward(xb, prepared))
    refb = reference_forward(xb, params)
    assert outb.shape == (300, ACTION_DIM)
    assert jnp.allclose(outb, refb, atol=2e-2, rtol=2e-2), "mismatch vs. reference (batch=300)"

    print("KERNEL_OK")
</pallas_src>

<mosaic_0001>
module attributes {stable_mosaic.version = 11 : i64} {
  func.func @td3_actor_kernel(%arg0: i32, %arg1: memref<8x11xf32, #tpu.memory_space<vmem>>, %arg2: memref<11x512xbf16, #tpu.memory_space<vmem>>, %arg3: memref<1x512xf32, #tpu.memory_space<vmem>>, %arg4: memref<512x384xbf16, #tpu.memory_space<vmem>>, %arg5: memref<1x384xf32, #tpu.memory_space<vmem>>, %arg6: memref<384x128xbf16, #tpu.memory_space<vmem>>, %arg7: memref<1x128xf32, #tpu.memory_space<vmem>>, %arg8: memref<8x128xf32, #tpu.memory_space<vmem>>) attributes {dimension_semantics = [#tpu.dimension_semantics<parallel>], iteration_bounds = array<i64: 1>, scalar_prefetch = 0 : i64, scratch_operands = 0 : i64, tpu.core_type = #tpu.core_type<tc>, window_params = [{transform_indices = @transform_0, window_bounds = array<i64: 8, 11>}, {pipeline_mode = #tpu.pipeline_mode<synchronous>, transform_indices = @transform_1, window_bounds = array<i64: 11, 512>}, {pipeline_mode = #tpu.pipeline_mode<synchronous>, transform_indices = @transform_2, window_bounds = array<i64: 1, 512>}, {pipeline_mode = #tpu.pipeline_mode<synchronous>, transform_indices = @transform_3, window_bounds = array<i64: 512, 384>}, {pipeline_mode = #tpu.pipeline_mode<synchronous>, transform_indices = @transform_4, window_bounds = array<i64: 1, 384>}, {pipeline_mode = #tpu.pipeline_mode<synchronous>, transform_indices = @transform_5, window_bounds = array<i64: 384, 128>}, {pipeline_mode = #tpu.pipeline_mode<synchronous>, transform_indices = @transform_6, window_bounds = array<i64: 1, 128>}, {transform_indices = @transform_7, window_bounds = array<i64: 8, 128>}]} {
    %c0 = arith.constant 0 : index
    %c0_0 = arith.constant 0 : index
    %0 = vector.load %arg1[%c0, %c0_0] : memref<8x11xf32, #tpu.memory_space<vmem>>, vector<8x11xf32>
    %1 = arith.truncf %0 : vector<8x11xf32> to vector<8x11xbf16>
    %c0_1 = arith.constant 0 : index
    %c0_2 = arith.constant 0 : index
    %2 = vector.load %arg2[%c0_1, %c0_2] : memref<11x512xbf16, #tpu.memory_space<vmem>>, vector<11x512xbf16>
    %cst = arith.constant dense<0.000000e+00> : vector<8x512xf32>
    %3 = tpu.matmul %1, %2, %cst {dimension_numbers = #tpu.dot_dimension_numbers<[1], [0], [0], [1], [0, 0, 1, 1], [], []>} : vector<8x11xbf16>, vector<11x512xbf16>, vector<8x512xf32> -> vector<8x512xf32>
    %c0_3 = arith.constant 0 : index
    %c0_4 = arith.constant 0 : index
    %4 = vector.load %arg3[%c0_3, %c0_4] : memref<1x512xf32, #tpu.memory_space<vmem>>, vector<1x512xf32>
    %5 = vector.broadcast %4 : vector<1x512xf32> to vector<8x512xf32>
    %6 = arith.addf %3, %5 : vector<8x512xf32>
    %cst_5 = arith.constant 0.000000e+00 : f32
    %7 = vector.broadcast %cst_5 : f32 to vector<8x512xf32>
    %8 = arith.maximumf %6, %7 : vector<8x512xf32>
    %9 = arith.truncf %8 : vector<8x512xf32> to vector<8x512xbf16>
    %c0_6 = arith.constant 0 : index
    %c0_7 = arith.constant 0 : index
    %10 = vector.load %arg4[%c0_6, %c0_7] : memref<512x384xbf16, #tpu.memory_space<vmem>>, vector<512x384xbf16>
    %cst_8 = arith.constant dense<0.000000e+00> : vector<8x384xf32>
    %11 = tpu.matmul %9, %10, %cst_8 {dimension_numbers = #tpu.dot_dimension_numbers<[1], [0], [0], [1], [0, 0, 1, 1], [], []>} : vector<8x512xbf16>, vector<512x384xbf16>, vector<8x384xf32> -> vector<8x384xf32>
    %c0_9 = arith.constant 0 : index
    %c0_10 = arith.constant 0 : index
    %12 = vector.load %arg5[%c0_9, %c0_10] : memref<1x384xf32, #tpu.memory_space<vmem>>, vector<1x384xf32>
    %13 = vector.broadcast %12 : vector<1x384xf32> to vector<8x384xf32>
    %14 = arith.addf %11, %13 : vector<8x384xf32>
    %cst_11 = arith.constant 0.000000e+00 : f32
    %15 = vector.broadcast %cst_11 : f32 to vector<8x384xf32>
    %16 = arith.maximumf %14, %15 : vector<8x384xf32>
    %17 = arith.truncf %16 : vector<8x384xf32> to vector<8x384xbf16>
    %c0_12 = arith.constant 0 : index
    %c0_13 = arith.constant 0 : index
    %18 = vector.load %arg6[%c0_12, %c0_13] : memref<384x128xbf16, #tpu.memory_space<vmem>>, vector<384x128xbf16>
    %cst_14 = arith.constant dense<0.000000e+00> : vector<8x128xf32>
    %19 = tpu.matmul %17, %18, %cst_14 {dimension_numbers = #tpu.dot_dimension_numbers<[1], [0], [0], [1], [0, 0, 1, 1], [], []>} : vector<8x384xbf16>, vector<384x128xbf16>, vector<8x128xf32> -> vector<8x128xf32>
    %c0_15 = arith.constant 0 : index
    %c0_16 = arith.constant 0 : index
    %20 = vector.load %arg7[%c0_15, %c0_16] : memref<1x128xf32, #tpu.memory_space<vmem>>, vector<1x128xf32>
    %21 = vector.broadcast %20 : vector<1x128xf32> to vector<8x128xf32>
    %22 = arith.addf %19, %21 : vector<8x128xf32>
    %23 = math.tanh %22 : vector<8x128xf32>
    %c0_17 = arith.constant 0 : index
    %c0_18 = arith.constant 0 : index
    %24 = vector.load %arg8[%c0_17, %c0_18] : memref<8x128xf32, #tpu.memory_space<vmem>>, vector<8x128xf32>
    tpu.vector_store %arg8[%c0_17, %c0_18], %23 {strides = array<i32>} : memref<8x128xf32, #tpu.memory_space<vmem>>, vector<8x128xf32>,
    return
  }
  func.func @transform_0(%arg0: i32) -> (i32, i32) {
    %c0_i32 = arith.constant 0 : i32
    %c0_i32_0 = arith.constant 0 : i32
    return %arg0, %c0_i32 : i32, i32
  }
  func.func @transform_1(%arg0: i32) -> (i32, i32) {
    %c0_i32 = arith.constant 0 : i32
    %c0_i32_0 = arith.constant 0 : i32
    %c0_i32_1 = arith.constant 0 : i32
    return %c0_i32, %c0_i32_0 : i32, i32
  }
  func.func @transform_2(%arg0: i32) -> (i32, i32) {
    %c0_i32 = arith.constant 0 : i32
    %c0_i32_0 = arith.constant 0 : i32
    %c0_i32_1 = arith.constant 0 : i32
    return %c0_i32, %c0_i32_0 : i32, i32
  }
  func.func @transform_3(%arg0: i32) -> (i32, i32) {
    %c0_i32 = arith.constant 0 : i32
    %c0_i32_0 = arith.constant 0 : i32
    %c0_i32_1 = arith.constant 0 : i32
    return %c0_i32, %c0_i32_0 : i32, i32
  }
  func.func @transform_4(%arg0: i32) -> (i32, i32) {
    %c0_i32 = arith.constant 0 : i32
    %c0_i32_0 = arith.constant 0 : i32
    %c0_i32_1 = arith.constant 0 : i32
    return %c0_i32, %c0_i32_0 : i32, i32
  }
  func.func @transform_5(%arg0: i32) -> (i32, i32) {
    %c0_i32 = arith.constant 0 : i32
    %c0_i32_0 = arith.constant 0 : i32
    %c0_i32_1 = arith.constant 0 : i32
    return %c0_i32, %c0_i32_0 : i32, i32
  }
  func.func @transform_6(%arg0: i32) -> (i32, i32) {
    %c0_i32 = arith.constant 0 : i32
    %c0_i32_0 = arith.constant 0 : i32
    %c0_i32_1 = arith.constant 0 : i32
    return %c0_i32, %c0_i32_0 : i32, i32
  }
  func.func @transform_7(%arg0: i32) -> (i32, i32) {
    %c0_i32 = arith.constant 0 : i32
    %c0_i32_0 = arith.constant 0 : i32
    return %arg0, %c0_i32 : i32, i32
  }
}

</mosaic_0001>

<llo_original>
// kernel: td3_actor_forward.1
$region0: #{td3_actor_forward.1}
  #allocation0 [shape = 'u32[]', space=smem, size = 0x4, offset = 0x4, fixed_abs, tag = 'smem constant byte address 0x4 - core index']
  #allocation1 [shape = 'u32[72,128]{1,0:T(1,128)}', space=vmem, size = 0x9000, scoped, tag = 'internal scratch']
  %s0 = inlined_call_operand.vmem [shape: f32[8,11], index: 0, kind: input, shape index: {}]
  %s1 = inlined_call_operand.hbm [shape: bf16[11,512], index: 1, kind: input, shape index: {}]
  %s2 = inlined_call_operand.vmem [shape: f32[1,512], index: 2, kind: input, shape index: {}]
  %s3 = inlined_call_operand.hbm [shape: bf16[512,384], index: 3, kind: input, shape index: {}]
  %s4 = inlined_call_operand.vmem [shape: f32[1,384], index: 4, kind: input, shape index: {}]
  %s5 = inlined_call_operand.hbm [shape: bf16[384,128], index: 5, kind: input, shape index: {}]
  %s6 = inlined_call_operand.vmem [shape: f32[1,128], index: 6, kind: input, shape index: {}]
  %s7 = inlined_call_operand.vmem [shape: f32[8,128], index: 7, kind: output, shape index: {}]
  %s8 = sld [smem:[#allocation0]]
  $region50: #{td3_actor_forward.1} parent=0
    _
  %s10 = ssub.s32 1, %s8
  %s11 = scalar_select 0, %s10, %s8
  $region1: #{td3_actor_forward.1} parent=0
    #allocation2 [shape = 'u8[16384]{0}', space=vmem, size = 0x4000, scoped, tag = 'input window, operand 1, single buffered']
    #allocation3 [shape = 's32[1]{0}', space=sflag, size = 0x4, scoped, tag = 'scoped memory for td3_actor_forward.1']
    #allocation4 [shape = 'u8[393216]{0}', space=vmem, size = 0x60000, scoped, tag = 'input window, operand 3, single buffered']
    #allocation5 [shape = 's32[1]{0}', space=sflag, size = 0x4, scoped, tag = 'scoped memory for td3_actor_forward.1']
    #allocation6 [shape = 'u8[98304]{0}', space=vmem, size = 0x18000, scoped, tag = 'input window, operand 5, single buffered']
    %12 = vsyncpa [#allocation3], 0
    %13 = vsyncpa [#allocation5], 0
    // Predicated region
    $region2: #{td3_actor_forward.1} parent=1 // pred_check
      _
    $region3: #{td3_actor_forward.1} parent=1 // pred_check_branch
      %15 = sbr.rel (0) target = $region5
    $region4: #{td3_actor_forward.1} parent=1 // pred_region
      _
    $region5: #{td3_actor_forward.1} parent=1 // pred_fallthru
      _
    // Predicated region
    $region6: #{td3_actor_forward.1} parent=1 // pred_check
      _
    $region7: #{td3_actor_forward.1} parent=1 // pred_check_branch
      %17 = sbr.rel (0) target = $region9
    $region8: #{td3_actor_forward.1} parent=1 // pred_region
      %19 = vsyncadd [#allocation3], 0
      %s20 = sshll.u32 %s1, 4
      %s21 = int_to_ptr.hbm [resolvable:$true] %s20
      %s22 = sshll.u32 [#allocation2], 4
      %s23 = int_to_ptr.vmem [resolvable:$true] %s22
      %28 = dma.hbm_to_vmem [thread:$0]  %s21, 512, %s23, [#allocation3], 256, 256, 16
    $region9: #{td3_actor_forward.1} parent=1 // pred_fallthru
      _
    // Predicated region
    $region10: #{td3_actor_forward.1} parent=1 // pred_check
      _
    $region11: #{td3_actor_forward.1} parent=1 // pred_check_branch
      %30 = sbr.rel (0) target = $region13
    $region12: #{td3_actor_forward.1} parent=1 // pred_region
      _
    $region13: #{td3_actor_forward.1} parent=1 // pred_fallthru
      _
    // Predicated region
    $region14: #{td3_actor_forward.1} parent=1 // pred_check
      _
    $region15: #{td3_actor_forward.1} parent=1 // pred_check_branch
      %32 = sbr.rel (0) target = $region17
    $region16: #{td3_actor_forward.1} parent=1 // pred_region
      %34 = vsyncadd [#allocation5], 0
      %s35 = sshll.u32 %s3, 4
      %s36 = int_to_ptr.hbm [resolvable:$true] %s35
      %s37 = sshll.u32 [#allocation4], 4
      %s38 = int_to_ptr.vmem [resolvable:$true] %s37
      %43 = dma.hbm_to_vmem [thread:$0]  %s36, 12288, %s38, [#allocation5], 192, 192, 12
    $region17: #{td3_actor_forward.1} parent=1 // pred_fallthru
      _
    // Predicated region
    $region18: #{td3_actor_forward.1} parent=1 // pred_check
      _
    $region19: #{td3_actor_forward.1} parent=1 // pred_check_branch
      %45 = sbr.rel (0) target = $region21
    $region20: #{td3_actor_forward.1} parent=1 // pred_region
      _
    $region21: #{td3_actor_forward.1} parent=1 // pred_fallthru
      _
    // Predicated region
    $region22: #{td3_actor_forward.1} parent=1 // pred_check
      _
    $region23: #{td3_actor_forward.1} parent=1 // pred_check_branch
      %47 = sbr.rel (0) target = $region25
    $region24: #{td3_actor_forward.1} parent=1 // pred_region
      %49 = vsyncadd [#allocation5], 0
      %s50 = sshll.u32 %s5, 4
      %s51 = int_to_ptr.hbm [resolvable:$true] %s50
      %s52 = sshll.u32 [#allocation6], 4
      %s53 = int_to_ptr.vmem [resolvable:$true] %s52
      %58 = dma.hbm_to_vmem [thread:$0]  %s51, 3072, %s53, [#allocation5], 64, 64, 4
    $region25: #{td3_actor_forward.1} parent=1 // pred_fallthru
      _
    // Predicated region
    $region26: #{td3_actor_forward.1} parent=1 // pred_check
      _
    $region27: #{td3_actor_forward.1} parent=1 // pred_check_branch
      %60 = sbr.rel (0) target = $region29
    $region28: #{td3_actor_forward.1} parent=1 // pred_region
      _
    $region29: #{td3_actor_forward.1} parent=1 // pred_fallthru
      _
    // Predicated region
    $region30: #{td3_actor_forward.1} parent=1 // pred_check
      _
    $region31: #{td3_actor_forward.1} parent=1 // pred_check_branch
      %62 = sbr.rel (0) target = $region33
    $region32: #{td3_actor_forward.1} parent=1 // pred_region
      %64 = dma.done [#allocation3], 512
    $region33: #{td3_actor_forward.1} parent=1 // pred_fallthru
      _
    // Predicated region
    $region34: #{td3_actor_forward.1} parent=1 // pred_check
      _
    $region35: #{td3_actor_forward.1} parent=1 // pred_check_branch
      %66 = sbr.rel (0) target = $region37
    $region36: #{td3_actor_forward.1} parent=1 // pred_region
      %68 = dma.done [#allocation5], 12288
    $region37: #{td3_actor_forward.1} parent=1 // pred_fallthru
      _
    // Predicated region
    $region38: #{td3_actor_forward.1} parent=1 // pred_check
      _
    $region39: #{td3_actor_forward.1} parent=1 // pred_check_branch
      %70 = sbr.rel (0) target = $region41
    $region40: #{td3_actor_forward.1} parent=1 // pred_region
      %72 = dma.done [#allocation5], 3072
    $region41: #{td3_actor_forward.1} parent=1 // pred_fallthru
      _
    %v74 = vld [vmem:[%s0] sm:$0xff]
    %v75 = vpack.c.bf16 %v74, %v74
    %v76 = vld [vmem:[#allocation2] sm:$0xff]
    %v77 = vld [vmem:[#allocation2 + $0x8] sm:$0xff]
    %v78 = vld [vmem:[#allocation2 + $0x10] sm:$0x33]
    %v79 = vld [vmem:[#allocation2 + $0x18] sm:$0x33]
    %v80 = vld [vmem:[%s2] sm:$0xf]
    %v82 = vperm.slane %v80, 0
    %v83 = vperm.slane %v80, 1
    %v84 = vperm.slane %v80, 2
    %v85 = vperm.slane %v80, 3
    %v94 = vunpack.c.l.b16 %v76
    %v95 = vunpack.c.h.b16 %v76
    %v96 = vunpack.c.l.b16 %v77
    %v97 = vunpack.c.h.b16 %v77
    %v98 = vunpack.c.l.b16 %v78
    %v99 = vunpack.c.h.b16 %v78
    %v100 = vunpack.c.l.b16 %v79
    %v101 = vunpack.c.h.b16 %v79
    %v102 = vpack.c.b16 %v98, %v94
    %v103 = vpack.c.b16 %v99, %v95
    %v104 = vpack.c.b16 %v100, %v96
    %v105 = vpack.c.b16 %v101, %v97
    %vm106 = vcmask 89088
    %v108 = vsel %vm106, %v75, 0
    %vm110 = vcmask 1044480
    %vm111 = vcmask 1045504
    %v112 = vsel %vm110, 4294967295, 65535
    %v113 = vsel %vm111, %v112, 0
    %v115 = vand.u32 %v102, %v113
    %v118 = vand.u32 %v103, %v113
    %v121 = vand.u32 %v104, %v113
    %v124 = vand.u32 %v105, %v113
    %126 = vmatpush.bf16.msra.mxu0 0
    %127 = vmatpush.bf16.msra.mxu0 0
    %128 = vmatpush.bf16.msra.mxu0 0
    %129 = vmatpush.bf16.msra.mxu0 0
    %130 = vmatpush.bf16.msra.mxu0 0
    %131 = vmatpush.bf16.msra.mxu0 0
    %132 = vmatpush.bf16.msra.mxu0 0
    %133 = vmatpush.bf16.msra.mxu0 %v115
    %134 = vmatmul.bf16.gmra.mxu0 %v108
    %v135 = vpop.f32.mrf.mxu0
    %v136 = vadd.f32 %v82, %v135
    %v137 = vpop.f32.mrf.mxu0
    %138 = vdwg.mxu0
    %139 = vmatpush.bf16.msra.mxu0 0
    %140 = vmatpush.bf16.msra.mxu0 0
    %141 = vmatpush.bf16.msra.mxu0 0
    %142 = vmatpush.bf16.msra.mxu0 0
    %143 = vmatpush.bf16.msra.mxu0 0
    %144 = vmatpush.bf16.msra.mxu0 0
    %145 = vmatpush.bf16.msra.mxu0 0
    %146 = vmatpush.bf16.msra.mxu0 %v118
    %147 = vmatmul.bf16.gmra.mxu0 %v108
    %v148 = vpop.f32.mrf.mxu0
    %v149 = vadd.f32 %v83, %v148
    %v150 = vpop.f32.mrf.mxu0
    %151 = vdwg.mxu0
    %152 = vmatpush.bf16.msra.mxu0 0
    %153 = vmatpush.bf16.msra.mxu0 0
    %154 = vmatpush.bf16.msra.mxu0 0
    %155 = vmatpush.bf16.msra.mxu0 0
    %156 = vmatpush.bf16.msra.mxu0 0
    %157 = vmatpush.bf16.msra.mxu0 0
    %158 = vmatpush.bf16.msra.mxu0 0
    %159 = vmatpush.bf16.msra.mxu0 %v121
    %160 = vmatmul.bf16.gmra.mxu0 %v108
    %v161 = vpop.f32.mrf.mxu0
    %v162 = vadd.f32 %v84, %v161
    %v163 = vpop.f32.mrf.mxu0
    %164 = vdwg.mxu0
    %165 = vmatpush.bf16.msra.mxu0 0
    %166 = vmatpush.bf16.msra.mxu0 0
    %167 = vmatpush.bf16.msra.mxu0 0
    %168 = vmatpush.bf16.msra.mxu0 0
    %169 = vmatpush.bf16.msra.mxu0 0
    %170 = vmatpush.bf16.msra.mxu0 0
    %171 = vmatpush.bf16.msra.mxu0 0
    %172 = vmatpush.bf16.msra.mxu0 %v124
    %173 = vmatmul.bf16.gmra.mxu0 %v108
    %v174 = vpop.f32.mrf.mxu0
    %v175 = vadd.f32 %v85, %v174
    %v176 = vpop.f32.mrf.mxu0
    %177 = vdwg.mxu0
    %v178 = vmax.f32 %v136, 0.0
    %v179 = vmax.f32 %v149, 0.0
    %v180 = vmax.f32 %v162, 0.0
    %v181 = vmax.f32 %v175, 0.0
    %v182 = vpack.c.bf16 %v178, %v178
    %v183 = vpack.c.bf16 %v179, %v179
    %v184 = vpack.c.bf16 %v180, %v180
    %v185 = vpack.c.bf16 %v181, %v181
    %v186 = vld [vmem:[#allocation4] sm:$0xff]
    %v187 = vld [vmem:[#allocation4 + $0x8] sm:$0xf]
    %v188 = vld [vmem:[#allocation4 + $0xc] sm:$0xff]
    %v189 = vld [vmem:[#allocation4 + $0x14] sm:$0xf]
    %v190 = vld [vmem:[#allocation4 + $0x18] sm:$0xff]
    %v191 = vld [vmem:[#allocation4 + $0x20] sm:$0xf]
    %v192 = vld [vmem:[#allocation4 + $0x24] sm:$0xff]
    %v193 = vld [vmem:[#allocation4 + $0x2c] sm:$0xf]
    %v194 = vld [vmem:[#allocation4 + $0x30] sm:$0xff]
    %v195 = vld [vmem:[#allocation4 + $0x38] sm:$0xf]
    %v196 = vld [vmem:[#allocation4 + $0x3c] sm:$0xff]
    %v197 = vld [vmem:[#allocation4 + $0x44] sm:$0xf]
    %v198 = vld [vmem:[#allocation4 + $0x48] sm:$0xff]
    %v199 = vld [vmem:[#allocation4 + $0x50] sm:$0xf]
    %v200 = vld [vmem:[#allocation4 + $0x54] sm:$0xff]
    %v201 = vld [vmem:[#allocation4 + $0x5c] sm:$0xf]
    %v202 = vld [vmem:[#allocation4 + $0x60] sm:$0xff]
    %v203 = vld [vmem:[#allocation4 + $0x68] sm:$0xf]
    %v204 = vld [vmem:[#allocation4 + $0x6c] sm:$0xff]
    %v205 = vld [vmem:[#allocation4 + $0x74] sm:$0xf]
    %v206 = vld [vmem:[#allocation4 + $0x78] sm:$0xff]
    %v207 = vld [vmem:[#allocation4 + $0x80] sm:$0xf]
    %v208 = vld [vmem:[#allocation4 + $0x84] sm:$0xff]
    %v209 = vld [vmem:[#allocation4 + $0x8c] sm:$0xf]
    %v210 = vld [vmem:[#allocation4 + $0x90] sm:$0xff]
    %v211 = vld [vmem:[#allocation4 + $0x98] sm:$0xf]
    %v212 = vld [vmem:[#allocation4 + $0x9c] sm:$0xff]
    %v213 = vld [vmem:[#allocation4 + $0xa4] sm:$0xf]
    %v214 = vld [vmem:[#allocation4 + $0xa8] sm:$0xff]
    %v215 = vld [vmem:[#allocation4 + $0xb0] sm:$0xf]
    %v216 = vld [vmem:[#allocation4 + $0xb4] sm:$0xff]
    %v217 = vld [vmem:[#allocation4 + $0xbc] sm:$0xf]
    %v218 = vld [vmem:[#allocation4 + $0xc0] sm:$0xff]
    %v219 = vld [vmem:[#allocation4 + $0xc8] sm:$0xf]
    %v220 = vld [vmem:[#allocation4 + $0xcc] sm:$0xff]
    %v221 = vld [vmem:[#allocation4 + $0xd4] sm:$0xf]
    %v222 = vld [vmem:[#allocation4 + $0xd8] sm:$0xff]
    %v223 = vld [vmem:[#allocation4 + $0xe0] sm:$0xf]
    %v224 = vld [vmem:[#allocation4 + $0xe4] sm:$0xff]
    %v225 = vld [vmem:[#allocation4 + $0xec] sm:$0xf]
    %v226 = vld [vmem:[#allocation4 + $0xf0] sm:$0xff]
    %v227 = vld [vmem:[#allocation4 + $0xf8] sm:$0xf]
    %v228 = vld [vmem:[#allocation4 + $0xfc] sm:$0xff]
    %v229 = vld [vmem:[#allocation4 + $0x104] sm:$0xf]
    %v230 = vld [vmem:[#allocation4 + $0x108] sm:$0xff]
    %v231 = vld [vmem:[#allocation4 + $0x110] sm:$0xf]
    %v232 = vld [vmem:[#allocation4 + $0x114] sm:$0xff]
    %v233 = vld [vmem:[#allocation4 + $0x11c] sm:$0xf]
    %v234 = vld [vmem:[#allocation4 + $0x120] sm:$0xff]
    %v235 = vld [vmem:[#allocation4 + $0x128] sm:$0xf]
    %v236 = vld [vmem:[#allocation4 + $0x12c] sm:$0xff]
    %v237 = vld [vmem:[#allocation4 + $0x134] sm:$0xf]
    %v238 = vld [vmem:[#allocation4 + $0x138] sm:$0xff]
    %v239 = vld [vmem:[#allocation4 + $0x140] sm:$0xf]
    %v240 = vld [vmem:[#allocation4 + $0x144] sm:$0xff]
    %v241 = vld [vmem:[#allocation4 + $0x14c] sm:$0xf]
    %v242 = vld [vmem:[#allocation4 + $0x150] sm:$0xff]
    %v243 = vld [vmem:[#allocation4 + $0x158] sm:$0xf]
    %v244 = vld [vmem:[#allocation4 + $0x15c] sm:$0xff]
    %v245 = vld [vmem:[#allocation4 + $0x164] sm:$0xf]
    %v246 = vld [vmem:[#allocation4 + $0x168] sm:$0xff]
    %v247 = vld [vmem:[#allocation4 + $0x170] sm:$0xf]
    %v248 = vld [vmem:[#allocation4 + $0x174] sm:$0xff]
    %v249 = vld [vmem:[#allocation4 + $0x17c] sm:$0xf]
    %v250 = vld [vmem:[#allocation4 + $0x180] sm:$0xff]
    %v251 = vld [vmem:[#allocation4 + $0x188] sm:$0xf]
    %v252 = vld [vmem:[#allocation4 + $0x18c] sm:$0xff]
    %v253 = vld [vmem:[#allocation4 + $0x194] sm:$0xf]
    %v254 = vld [vmem:[#allocation4 + $0x198] sm:$0xff]
    %v255 = vld [vmem:[#allocation4 + $0x1a0] sm:$0xf]
    %v256 = vld [vmem:[#allocation4 + $0x1a4] sm:$0xff]
    %v257 = vld [vmem:[#allocation4 + $0x1ac] sm:$0xf]
    %v258 = vld [vmem:[#allocation4 + $0x1b0] sm:$0xff]
    %v259 = vld [vmem:[#allocation4 + $0x1b8] sm:$0xf]
    %v260 = vld [vmem:[#allocation4 + $0x1bc] sm:$0xff]
    %v261 = vld [vmem:[#allocation4 + $0x1c4] sm:$0xf]
    %v262 = vld [vmem:[#allocation4 + $0x1c8] sm:$0xff]
    %v263 = vld [vmem:[#allocation4 + $0x1d0] sm:$0xf]
    %v264 = vld [vmem:[#allocation4 + $0x1d4] sm:$0xff]
    %v265 = vld [vmem:[#allocation4 + $0x1dc] sm:$0xf]
    %v266 = vld [vmem:[#allocation4 + $0x1e0] sm:$0xff]
    %v267 = vld [vmem:[#allocation4 + $0x1e8] sm:$0xf]
    %v268 = vld [vmem:[#allocation4 + $0x1ec] sm:$0xff]
    %v269 = vld [vmem:[#allocation4 + $0x1f4] sm:$0xf]
    %v270 = vld [vmem:[#allocation4 + $0x1f8] sm:$0xff]
    %v271 = vld [vmem:[#allocation4 + $0x200] sm:$0xf]
    %v272 = vld [vmem:[#allocation4 + $0x204] sm:$0xff]
    %v273 = vld [vmem:[#allocation4 + $0x20c] sm:$0xf]
    %v274 = vld [vmem:[#allocation4 + $0x210] sm:$0xff]
    %v275 = vld [vmem:[#allocation4 + $0x218] sm:$0xf]
    %v276 = vld [vmem:[#allocation4 + $0x21c] sm:$0xff]
    %v277 = vld [vmem:[#allocation4 + $0x224] sm:$0xf]
    %v278 = vld [vmem:[#allocation4 + $0x228] sm:$0xff]
    %v279 = vld [vmem:[#allocation4 + $0x230] sm:$0xf]
    %v280 = vld [vmem:[#allocation4 + $0x234] sm:$0xff]
    %v281 = vld [vmem:[#allocation4 + $0x23c] sm:$0xf]
    %v282 = vld [vmem:[#allocation4 + $0x240] sm:$0xff]
    %v283 = vld [vmem:[#allocation4 + $0x248] sm:$0xf]
    %v284 = vld [vmem:[#allocation4 + $0x24c] sm:$0xff]
    %v285 = vld [vmem:[#allocation4 + $0x254] sm:$0xf]
    %v286 = vld [vmem:[#allocation4 + $0x258] sm:$0xff]
    %v287 = vld [vmem:[#allocation4 + $0x260] sm:$0xf]
    %v288 = vld [vmem:[#allocation4 + $0x264] sm:$0xff]
    %v289 = vld [vmem:[#allocation4 + $0x26c] sm:$0xf]
    %v290 = vld [vmem:[#allocation4 + $0x270] sm:$0xff]
    %v291 = vld [vmem:[#allocation4 + $0x278] sm:$0xf]
    %v292 = vld [vmem:[#allocation4 + $0x27c] sm:$0xff]
    %v293 = vld [vmem:[#allocation4 + $0x284] sm:$0xf]
    %v294 = vld [vmem:[#allocation4 + $0x288] sm:$0xff]
    %v295 = vld [vmem:[#allocation4 + $0x290] sm:$0xf]
    %v296 = vld [vmem:[#allocation4 + $0x294] sm:$0xff]
    %v297 = vld [vmem:[#allocation4 + $0x29c] sm:$0xf]
    %v298 = vld [vmem:[#allocation4 + $0x2a0] sm:$0xff]
    %v299 = vld [vmem:[#allocation4 + $0x2a8] sm:$0xf]
    %v300 = vld [vmem:[#allocation4 + $0x2ac] sm:$0xff]
    %v301 = vld [vmem:[#allocation4 + $0x2b4] sm:$0xf]
    %v302 = vld [vmem:[#allocation4 + $0x2b8] sm:$0xff]
    %v303 = vld [vmem:[#allocation4 + $0x2c0] sm:$0xf]
    %v304 = vld [vmem:[#allocation4 + $0x2c4] sm:$0xff]
    %v305 = vld [vmem:[#allocation4 + $0x2cc] sm:$0xf]
    %v306 = vld [vmem:[#allocation4 + $0x2d0] sm:$0xff]
    %v307 = vld [vmem:[#allocation4 + $0x2d8] sm:$0xf]
    %v308 = vld [vmem:[#allocation4 + $0x2dc] sm:$0xff]
    %v309 = vld [vmem:[#allocation4 + $0x2e4] sm:$0xf]
    %v310 = vld [vmem:[#allocation4 + $0x2e8] sm:$0xff]
    %v311 = vld [vmem:[#allocation4 + $0x2f0] sm:$0xf]
    %v312 = vld [vmem:[#allocation4 + $0x2f4] sm:$0xff]
    %v313 = vld [vmem:[#allocation4 + $0x2fc] sm:$0xf]
    %v314 = vld [vmem:[%s4] sm:$0x7]
    %v316 = vperm.slane %v314, 0
    %v317 = vperm.slane %v314, 1
    %v318 = vperm.slane %v314, 2
    %v450 = vunpack.c.l.b16 %v186
    %v451 = vunpack.c.h.b16 %v186
    %v452 = vunpack.c.l.b16 %v187
    %v453 = vunpack.c.l.b16 %v188
    %v454 = vunpack.c.h.b16 %v188
    %v455 = vunpack.c.l.b16 %v189
    %v456 = vunpack.c.l.b16 %v190
    %v457 = vunpack.c.h.b16 %v190
    %v458 = vunpack.c.l.b16 %v191
    %v459 = vunpack.c.l.b16 %v192
    %v460 = vunpack.c.h.b16 %v192
    %v461 = vunpack.c.l.b16 %v193
    %v462 = vunpack.c.l.b16 %v194
    %v463 = vunpack.c.h.b16 %v194
    %v464 = vunpack.c.l.b16 %v195
    %v465 = vunpack.c.l.b16 %v196
    %v466 = vunpack.c.h.b16 %v196
    %v467 = vunpack.c.l.b16 %v197
    %v468 = vunpack.c.l.b16 %v198
    %v469 = vunpack.c.h.b16 %v198
    %v470 = vunpack.c.l.b16 %v199
    %v471 = vunpack.c.l.b16 %v200
    %v472 = vunpack.c.h.b16 %v200
    %v473 = vunpack.c.l.b16 %v201
    %v474 = vunpack.c.l.b16 %v202
    %v475 = vunpack.c.h.b16 %v202
    %v476 = vunpack.c.l.b16 %v203
    %v477 = vunpack.c.l.b16 %v204
    %v478 = vunpack.c.h.b16 %v204
    %v479 = vunpack.c.l.b16 %v205
    %v480 = vunpack.c.l.b16 %v206
    %v481 = vunpack.c.h.b16 %v206
    %v482 = vunpack.c.l.b16 %v207
    %v483 = vunpack.c.l.b16 %v208
    %v484 = vunpack.c.h.b16 %v208
    %v485 = vunpack.c.l.b16 %v209
    %v486 = vunpack.c.l.b16 %v210
    %v487 = vunpack.c.h.b16 %v210
    %v488 = vunpack.c.l.b16 %v211
    %v489 = vunpack.c.l.b16 %v212
    %v490 = vunpack.c.h.b16 %v212
    %v491 = vunpack.c.l.b16 %v213
    %v492 = vunpack.c.l.b16 %v214
    %v493 = vunpack.c.h.b16 %v214
    %v494 = vunpack.c.l.b16 %v215
    %v495 = vunpack.c.l.b16 %v216
    %v496 = vunpack.c.h.b16 %v216
    %v497 = vunpack.c.l.b16 %v217
    %v498 = vunpack.c.l.b16 %v218
    %v499 = vunpack.c.h.b16 %v218
    %v500 = vunpack.c.l.b16 %v219
    %v501 = vunpack.c.l.b16 %v220
    %v502 = vunpack.c.h.b16 %v220
    %v503 = vunpack.c.l.b16 %v221
    %v504 = vunpack.c.l.b16 %v222
    %v505 = vunpack.c.h.b16 %v222
    %v506 = vunpack.c.l.b16 %v223
    %v507 = vunpack.c.l.b16 %v224
    %v508 = vunpack.c.h.b16 %v224
    %v509 = vunpack.c.l.b16 %v225
    %v510 = vunpack.c.l.b16 %v226
    %v511 = vunpack.c.h.b16 %v226
    %v512 = vunpack.c.l.b16 %v227
    %v513 = vunpack.c.l.b16 %v228
    %v514 = vunpack.c.h.b16 %v228
    %v515 = vunpack.c.l.b16 %v229
    %v516 = vunpack.c.l.b16 %v230
    %v517 = vunpack.c.h.b16 %v230
    %v518 = vunpack.c.l.b16 %v231
    %v519 = vunpack.c.l.b16 %v232
    %v520 = vunpack.c.h.b16 %v232
    %v521 = vunpack.c.l.b16 %v233
    %v522 = vunpack.c.l.b16 %v234
    %v523 = vunpack.c.h.b16 %v234
    %v524 = vunpack.c.l.b16 %v235
    %v525 = vunpack.c.l.b16 %v236
    %v526 = vunpack.c.h.b16 %v236
    %v527 = vunpack.c.l.b16 %v237
    %v528 = vunpack.c.l.b16 %v238
    %v529 = vunpack.c.h.b16 %v238
    %v530 = vunpack.c.l.b16 %v239
    %v531 = vunpack.c.l.b16 %v240
    %v532 = vunpack.c.h.b16 %v240
    %v533 = vunpack.c.l.b16 %v241
    %v534 = vunpack.c.l.b16 %v242
    %v535 = vunpack.c.h.b16 %v242
    %v536 = vunpack.c.l.b16 %v243
    %v537 = vunpack.c.l.b16 %v244
    %v538 = vunpack.c.h.b16 %v244
    %v539 = vunpack.c.l.b16 %v245
    %v540 = vunpack.c.l.b16 %v246
    %v541 = vunpack.c.h.b16 %v246
    %v542 = vunpack.c.l.b16 %v247
    %v543 = vunpack.c.l.b16 %v248
    %v544 = vunpack.c.h.b16 %v248
    %v545 = vunpack.c.l.b16 %v249
    %v546 = vunpack.c.l.b16 %v250
    %v547 = vunpack.c.h.b16 %v250
    %v548 = vunpack.c.l.b16 %v251
    %v549 = vunpack.c.l.b16 %v252
    %v550 = vunpack.c.h.b16 %v252
    %v551 = vunpack.c.l.b16 %v253
    %v552 = vunpack.c.l.b16 %v254
    %v553 = vunpack.c.h.b16 %v254
    %v554 = vunpack.c.l.b16 %v255
    %v555 = vunpack.c.l.b16 %v256
    %v556 = vunpack.c.h.b16 %v256
    %v557 = vunpack.c.l.b16 %v257
    %v558 = vunpack.c.l.b16 %v258
    %v559 = vunpack.c.h.b16 %v258
    %v560 = vunpack.c.l.b16 %v259
    %v561 = vunpack.c.l.b16 %v260
    %v562 = vunpack.c.h.b16 %v260
    %v563 = vunpack.c.l.b16 %v261
    %v564 = vunpack.c.l.b16 %v262
    %v565 = vunpack.c.h.b16 %v262
    %v566 = vunpack.c.l.b16 %v263
    %v567 = vunpack.c.l.b16 %v264
    %v568 = vunpack.c.h.b16 %v264
    %v569 = vunpack.c.l.b16 %v265
    %v570 = vunpack.c.l.b16 %v266
    %v571 = vunpack.c.h.b16 %v266
    %v572 = vunpack.c.l.b16 %v267
    %v573 = vunpack.c.l.b16 %v268
    %v574 = vunpack.c.h.b16 %v268
    %v575 = vunpack.c.l.b16 %v269
    %v576 = vunpack.c.l.b16 %v270
    %v577 = vunpack.c.h.b16 %v270
    %v578 = vunpack.c.l.b16 %v271
    %v579 = vunpack.c.l.b16 %v272
    %v580 = vunpack.c.h.b16 %v272
    %v581 = vunpack.c.l.b16 %v273
    %v582 = vunpack.c.l.b16 %v274
    %v583 = vunpack.c.h.b16 %v274
    %v584 = vunpack.c.l.b16 %v275
    %v585 = vunpack.c.l.b16 %v276
    %v586 = vunpack.c.h.b16 %v276
    %v587 = vunpack.c.l.b16 %v277
    %v588 = vunpack.c.l.b16 %v278
    %v589 = vunpack.c.h.b16 %v278
    %v590 = vunpack.c.l.b16 %v279
    %v591 = vunpack.c.l.b16 %v280
    %v592 = vunpack.c.h.b16 %v280
    %v593 = vunpack.c.l.b16 %v281
    %v594 = vunpack.c.l.b16 %v282
    %v595 = vunpack.c.h.b16 %v282
    %v596 = vunpack.c.l.b16 %v283
    %v597 = vunpack.c.l.b16 %v284
    %v598 = vunpack.c.h.b16 %v284
    %v599 = vunpack.c.l.b16 %v285
    %v600 = vunpack.c.l.b16 %v286
    %v601 = vunpack.c.h.b16 %v286
    %v602 = vunpack.c.l.b16 %v287
    %v603 = vunpack.c.l.b16 %v288
    %v604 = vunpack.c.h.b16 %v288
    %v605 = vunpack.c.l.b16 %v289
    %v606 = vunpack.c.l.b16 %v290
    %v607 = vunpack.c.h.b16 %v290
    %v608 = vunpack.c.l.b16 %v291
    %v609 = vunpack.c.l.b16 %v292
    %v610 = vunpack.c.h.b16 %v292
    %v611 = vunpack.c.l.b16 %v293
    %v612 = vunpack.c.l.b16 %v294
    %v613 = vunpack.c.h.b16 %v294
    %v614 = vunpack.c.l.b16 %v295
    %v615 = vunpack.c.l.b16 %v296
    %v616 = vunpack.c.h.b16 %v296
    %v617 = vunpack.c.l.b16 %v297
    %v618 = vunpack.c.l.b16 %v298
    %v619 = vunpack.c.h.b16 %v298
    %v620 = vunpack.c.l.b16 %v299
    %v621 = vunpack.c.l.b16 %v300
    %v622 = vunpack.c.h.b16 %v300
    %v623 = vunpack.c.l.b16 %v301
    %v624 = vunpack.c.l.b16 %v302
    %v625 = vunpack.c.h.b16 %v302
    %v626 = vunpack.c.l.b16 %v303
    %v627 = vunpack.c.l.b16 %v304
    %v628 = vunpack.c.h.b16 %v304
    %v629 = vunpack.c.l.b16 %v305
    %v630 = vunpack.c.l.b16 %v306
    %v631 = vunpack.c.h.b16 %v306
    %v632 = vunpack.c.l.b16 %v307
    %v633 = vunpack.c.l.b16 %v308
    %v634 = vunpack.c.h.b16 %v308
    %v635 = vunpack.c.l.b16 %v309
    %v636 = vunpack.c.l.b16 %v310
    %v637 = vunpack.c.h.b16 %v310
    %v638 = vunpack.c.l.b16 %v311
    %v639 = vunpack.c.l.b16 %v312
    %v640 = vunpack.c.h.b16 %v312
    %v641 = vunpack.c.l.b16 %v313
    %v642 = vpack.c.b16 %v453, %v450
    %v643 = vpack.c.b16 %v454, %v451
    %v644 = vpack.c.b16 %v455, %v452
    %v645 = vpack.c.b16 %v459, %v456
    %v646 = vpack.c.b16 %v460, %v457
    %v647 = vpack.c.b16 %v461, %v458
    %v648 = vpack.c.b16 %v465, %v462
    %v649 = vpack.c.b16 %v466, %v463
    %v650 = vpack.c.b16 %v467, %v464
    %v651 = vpack.c.b16 %v471, %v468
    %v652 = vpack.c.b16 %v472, %v469
    %v653 = vpack.c.b16 %v473, %v470
    %v654 = vpack.c.b16 %v477, %v474
    %v655 = vpack.c.b16 %v478, %v475
    %v656 = vpack.c.b16 %v479, %v476
    %v657 = vpack.c.b16 %v483, %v480
    %v658 = vpack.c.b16 %v484, %v481
    %v659 = vpack.c.b16 %v485, %v482
    %v660 = vpack.c.b16 %v489, %v486
    %v661 = vpack.c.b16 %v490, %v487
    %v662 = vpack.c.b16 %v491, %v488
    %v663 = vpack.c.b16 %v495, %v492
    %v664 = vpack.c.b16 %v496, %v493
    %v665 = vpack.c.b16 %v497, %v494
    %v666 = vpack.c.b16 %v501, %v498
    %v667 = vpack.c.b16 %v502, %v499
    %v668 = vpack.c.b16 %v503, %v500
    %v669 = vpack.c.b16 %v507, %v504
    %v670 = vpack.c.b16 %v508, %v505
    %v671 = vpack.c.b16 %v509, %v506
    %v672 = vpack.c.b16 %v513, %v510
    %v673 = vpack.c.b16 %v514, %v511
    %v674 = vpack.c.b16 %v515, %v512
    %v675 = vpack.c.b16 %v519, %v516
    %v676 = vpack.c.b16 %v520, %v517
    %v677 = vpack.c.b16 %v521, %v518
    %v678 = vpack.c.b16 %v525, %v522
    %v679 = vpack.c.b16 %v526, %v523
    %v680 = vpack.c.b16 %v527, %v524
    %v681 = vpack.c.b16 %v531, %v528
    %v682 = vpack.c.b16 %v532, %v529
    %v683 = vpack.c.b16 %v533, %v530
    %v684 = vpack.c.b16 %v537, %v534
    %v685 = vpack.c.b16 %v538, %v535
    %v686 = vpack.c.b16 %v539, %v536
    %v687 = vpack.c.b16 %v543, %v540
    %v688 = vpack.c.b16 %v544, %v541
    %v689 = vpack.c.b16 %v545, %v542
    %v690 = vpack.c.b16 %v549, %v546
    %v691 = vpack.c.b16 %v550, %v547
    %v692 = vpack.c.b16 %v551, %v548
    %v693 = vpack.c.b16 %v555, %v552
    %v694 = vpack.c.b16 %v556, %v553
    %v695 = vpack.c.b16 %v557, %v554
    %v696 = vpack.c.b16 %v561, %v558
    %v697 = vpack.c.b16 %v562, %v559
    %v698 = vpack.c.b16 %v563, %v560
    %v699 = vpack.c.b16 %v567, %v564
    %v700 = vpack.c.b16 %v568, %v565
    %v701 = vpack.c.b16 %v569, %v566
    %v702 = vpack.c.b16 %v573, %v570
    %v703 = vpack.c.b16 %v574, %v571
    %v704 = vpack.c.b16 %v575, %v572
    %v705 = vpack.c.b16 %v579, %v576
    %v706 = vpack.c.b16 %v580, %v577
    %v707 = vpack.c.b16 %v581, %v578
    %v708 = vpack.c.b16 %v585, %v582
    %v709 = vpack.c.b16 %v586, %v583
    %v710 = vpack.c.b16 %v587, %v584
    %v711 = vpack.c.b16 %v591, %v588
    %v712 = vpack.c.b16 %v592, %v589
    %v713 = vpack.c.b16 %v593, %v590
    %v714 = vpack.c.b16 %v597, %v594
    %v715 = vpack.c.b16 %v598, %v595
    %v716 = vpack.c.b16 %v599, %v596
    %v717 = vpack.c.b16 %v603, %v600
    %v718 = vpack.c.b16 %v604, %v601
    %v719 = vpack.c.b16 %v605, %v602
    %v720 = vpack.c.b16 %v609, %v606
    %v721 = vpack.c.b16 %v610, %v607
    %v722 = vpack.c.b16 %v611, %v608
    %v723 = vpack.c.b16 %v615, %v612
    %v724 = vpack.c.b16 %v616, %v613
    %v725 = vpack.c.b16 %v617, %v614
    %v726 = vpack.c.b16 %v621, %v618
    %v727 = vpack.c.b16 %v622, %v619
    %v728 = vpack.c.b16 %v623, %v620
    %v729 = vpack.c.b16 %v627, %v624
    %v730 = vpack.c.b16 %v628, %v625
    %v731 = vpack.c.b16 %v629, %v626
    %v732 = vpack.c.b16 %v633, %v630
    %v733 = vpack.c.b16 %v634, %v631
    %v734 = vpack.c.b16 %v635, %v632
    %v735 = vpack.c.b16 %v639, %v636
    %v736 = vpack.c.b16 %v640, %v637
    %v737 = vpack.c.b16 %v641, %v638
    %834 = vmatpush.bf16.msra.mxu0 %v663
    %835 = vmatpush.bf16.msra.mxu0 %v660
    %836 = vmatpush.bf16.msra.mxu0 %v657
    %837 = vmatpush.bf16.msra.mxu0 %v654
    %838 = vmatpush.bf16.msra.mxu0 %v651
    %839 = vmatpush.bf16.msra.mxu0 %v648
    %840 = vmatpush.bf16.msra.mxu0 %v645
    %841 = vmatpush.bf16.msra.mxu0 %v642
    %842 = vmatmul.bf16.gmra.mxu0 %v182
    %v843 = vpop.f32.mrf.mxu0
    %v844 = vadd.f32 %v316, %v843
    %v845 = vpop.f32.mrf.mxu0
    %846 = vdwg.mxu0
    %847 = vmatpush.bf16.msra.mxu0 %v687
    %848 = vmatpush.bf16.msra.mxu0 %v684
    %849 = vmatpush.bf16.msra.mxu0 %v681
    %850 = vmatpush.bf16.msra.mxu0 %v678
    %851 = vmatpush.bf16.msra.mxu0 %v675
    %852 = vmatpush.bf16.msra.mxu0 %v672
    %853 = vmatpush.bf16.msra.mxu0 %v669
    %854 = vmatpush.bf16.msra.mxu0 %v666
    %855 = vmatmul.bf16.gmra.mxu0 %v183
    %v856 = vpop.f32.mrf.mxu0
    %v857 = vadd.f32 %v844, %v856
    %v858 = vpop.f32.mrf.mxu0
    %859 = vdwg.mxu0
    %860 = vmatpush.bf16.msra.mxu0 %v711
    %861 = vmatpush.bf16.msra.mxu0 %v708
    %862 = vmatpush.bf16.msra.mxu0 %v705
    %863 = vmatpush.bf16.msra.mxu0 %v702
    %864 = vmatpush.bf16.msra.mxu0 %v699
    %865 = vmatpush.bf16.msra.mxu0 %v696
    %866 = vmatpush.bf16.msra.mxu0 %v693
    %867 = vmatpush.bf16.msra.mxu0 %v690
    %868 = vmatmul.bf16.gmra.mxu0 %v184
    %v869 = vpop.f32.mrf.mxu0
    %v870 = vadd.f32 %v857, %v869
    %v871 = vpop.f32.mrf.mxu0
    %872 = vdwg.mxu0
    %873 = vmatpush.bf16.msra.mxu0 %v735
    %874 = vmatpush.bf16.msra.mxu0 %v732
    %875 = vmatpush.bf16.msra.mxu0 %v729
    %876 = vmatpush.bf16.msra.mxu0 %v726
    %877 = vmatpush.bf16.msra.mxu0 %v723
    %878 = vmatpush.bf16.msra.mxu0 %v720
    %879 = vmatpush.bf16.msra.mxu0 %v717
    %880 = vmatpush.bf16.msra.mxu0 %v714
    %881 = vmatmul.bf16.gmra.mxu0 %v185
    %v882 = vpop.f32.mrf.mxu0
    %v883 = vadd.f32 %v870, %v882
    %v884 = vpop.f32.mrf.mxu0
    %885 = vdwg.mxu0
    %886 = vmatpush.bf16.msra.mxu0 %v664
    %887 = vmatpush.bf16.msra.mxu0 %v661
    %888 = vmatpush.bf16.msra.mxu0 %v658
    %889 = vmatpush.bf16.msra.mxu0 %v655
    %890 = vmatpush.bf16.msra.mxu0 %v652
    %891 = vmatpush.bf16.msra.mxu0 %v649
    %892 = vmatpush.bf16.msra.mxu0 %v646
    %893 = vmatpush.bf16.msra.mxu0 %v643
    %894 = vmatmul.bf16.gmra.mxu0 %v182
    %v895 = vpop.f32.mrf.mxu0
    %v896 = vadd.f32 %v317, %v895
    %v897 = vpop.f32.mrf.mxu0
    %898 = vdwg.mxu0
    %899 = vmatpush.bf16.msra.mxu0 %v688
    %900 = vmatpush.bf16.msra.mxu0 %v685
    %901 = vmatpush.bf16.msra.mxu0 %v682
    %902 = vmatpush.bf16.msra.mxu0 %v679
    %903 = vmatpush.bf16.msra.mxu0 %v676
    %904 = vmatpush.bf16.msra.mxu0 %v673
    %905 = vmatpush.bf16.msra.mxu0 %v670
    %906 = vmatpush.bf16.msra.mxu0 %v667
    %907 = vmatmul.bf16.gmra.mxu0 %v183
    %v908 = vpop.f32.mrf.mxu0
    %v909 = vadd.f32 %v896, %v908
    %v910 = vpop.f32.mrf.mxu0
    %911 = vdwg.mxu0
    %912 = vmatpush.bf16.msra.mxu0 %v712
    %913 = vmatpush.bf16.msra.mxu0 %v709
    %914 = vmatpush.bf16.msra.mxu0 %v706
    %915 = vmatpush.bf16.msra.mxu0 %v703
    %916 = vmatpush.bf16.msra.mxu0 %v700
    %917 = vmatpush.bf16.msra.mxu0 %v697
    %918 = vmatpush.bf16.msra.mxu0 %v694
    %919 = vmatpush.bf16.msra.mxu0 %v691
    %920 = vmatmul.bf16.gmra.mxu0 %v184
    %v921 = vpop.f32.mrf.mxu0
    %v922 = vadd.f32 %v909, %v921
    %v923 = vpop.f32.mrf.mxu0
    %924 = vdwg.mxu0
    %925 = vmatpush.bf16.msra.mxu0 %v736
    %926 = vmatpush.bf16.msra.mxu0 %v733
    %927 = vmatpush.bf16.msra.mxu0 %v730
    %928 = vmatpush.bf16.msra.mxu0 %v727
    %929 = vmatpush.bf16.msra.mxu0 %v724
    %930 = vmatpush.bf16.msra.mxu0 %v721
    %931 = vmatpush.bf16.msra.mxu0 %v718
    %932 = vmatpush.bf16.msra.mxu0 %v715
    %933 = vmatmul.bf16.gmra.mxu0 %v185
    %v934 = vpop.f32.mrf.mxu0
    %v935 = vadd.f32 %v922, %v934
    %v936 = vpop.f32.mrf.mxu0
    %937 = vdwg.mxu0
    %938 = vmatpush.bf16.msra.mxu0 %v665
    %939 = vmatpush.bf16.msra.mxu0 %v662
    %940 = vmatpush.bf16.msra.mxu0 %v659
    %941 = vmatpush.bf16.msra.mxu0 %v656
    %942 = vmatpush.bf16.msra.mxu0 %v653
    %943 = vmatpush.bf16.msra.mxu0 %v650
    %944 = vmatpush.bf16.msra.mxu0 %v647
    %945 = vmatpush.bf16.msra.mxu0 %v644
    %946 = vmatmul.bf16.gmra.mxu0 %v182
    %v947 = vpop.f32.mrf.mxu0
    %v948 = vadd.f32 %v318, %v947
    %v949 = vpop.f32.mrf.mxu0
    %950 = vdwg.mxu0
    %951 = vmatpush.bf16.msra.mxu0 %v689
    %952 = vmatpush.bf16.msra.mxu0 %v686
    %953 = vmatpush.bf16.msra.mxu0 %v683
    %954 = vmatpush.bf16.msra.mxu0 %v680
    %955 = vmatpush.bf16.msra.mxu0 %v677
    %956 = vmatpush.bf16.msra.mxu0 %v674
    %957 = vmatpush.bf16.msra.mxu0 %v671
    %958 = vmatpush.bf16.msra.mxu0 %v668
    %959 = vmatmul.bf16.gmra.mxu0 %v183
    %v960 = vpop.f32.mrf.mxu0
    %v961 = vadd.f32 %v948, %v960
    %v962 = vpop.f32.mrf.mxu0
    %963 = vdwg.mxu0
    %964 = vmatpush.bf16.msra.mxu0 %v713
    %965 = vmatpush.bf16.msra.mxu0 %v710
    %966 = vmatpush.bf16.msra.mxu0 %v707
    %967 = vmatpush.bf16.msra.mxu0 %v704
    %968 = vmatpush.bf16.msra.mxu0 %v701
    %969 = vmatpush.bf16.msra.mxu0 %v698
    %970 = vmatpush.bf16.msra.mxu0 %v695
    %971 = vmatpush.bf16.msra.mxu0 %v692
    %972 = vmatmul.bf16.gmra.mxu0 %v184
    %v973 = vpop.f32.mrf.mxu0
    %v974 = vadd.f32 %v961, %v973
    %v975 = vpop.f32.mrf.mxu0
    %976 = vdwg.mxu0
    %977 = vmatpush.bf16.msra.mxu0 %v737
    %978 = vmatpush.bf16.msra.mxu0 %v734
    %979 = vmatpush.bf16.msra.mxu0 %v731
    %980 = vmatpush.bf16.msra.mxu0 %v728
    %981 = vmatpush.bf16.msra.mxu0 %v725
    %982 = vmatpush.bf16.msra.mxu0 %v722
    %983 = vmatpush.bf16.msra.mxu0 %v719
    %984 = vmatpush.bf16.msra.mxu0 %v716
    %985 = vmatmul.bf16.gmra.mxu0 %v185
    %v986 = vpop.f32.mrf.mxu0
    %v987 = vadd.f32 %v974, %v986
    %v988 = vpop.f32.mrf.mxu0
    %989 = vdwg.mxu0
    %v990 = vmax.f32 %v883, 0.0
    %v991 = vmax.f32 %v935, 0.0
    %v992 = vmax.f32 %v987, 0.0
    %v993 = vpack.c.bf16 %v990, %v990
    %v994 = vpack.c.bf16 %v991, %v991
    %v995 = vpack.c.bf16 %v992, %v992
    %v996 = vld [vmem:[#allocation6] sm:$0xf]
    %v997 = vld [vmem:[#allocation6 + $0x4] sm:$0xf]
    %v998 = vld [vmem:[#allocation6 + $0x8] sm:$0xf]
    %v999 = vld [vmem:[#allocation6 + $0xc] sm:$0xf]
    %v1000 = vld [vmem:[#allocation6 + $0x10] sm:$0xf]
    %v1001 = vld [vmem:[#allocation6 + $0x14] sm:$0xf]
    %v1002 = vld [vmem:[#allocation6 + $0x18] sm:$0xf]
    %v1003 = vld [vmem:[#allocation6 + $0x1c] sm:$0xf]
    %v1004 = vld [vmem:[#allocation6 + $0x20] sm:$0xf]
    %v1005 = vld [vmem:[#allocation6 + $0x24] sm:$0xf]
    %v1006 = vld [vmem:[#allocation6 + $0x28] sm:$0xf]
    %v1007 = vld [vmem:[#allocation6 + $0x2c] sm:$0xf]
    %v1008 = vld [vmem:[#allocation6 + $0x30] sm:$0xf]
    %v1009 = vld [vmem:[#allocation6 + $0x34] sm:$0xf]
    %v1010 = vld [vmem:[#allocation6 + $0x38] sm:$0xf]
    %v1011 = vld [vmem:[#allocation6 + $0x3c] sm:$0xf]
    %v1012 = vld [vmem:[#allocation6 + $0x40] sm:$0xf]
    %v1013 = vld [vmem:[#allocation6 + $0x44] sm:$0xf]
    %v1014 = vld [vmem:[#allocation6 + $0x48] sm:$0xf]
    %v1015 = vld [vmem:[#allocation6 + $0x4c] sm:$0xf]
    %v1016 = vld [vmem:[#allocation6 + $0x50] sm:$0xf]
    %v1017 = vld [vmem:[#allocation6 + $0x54] sm:$0xf]
    %v1018 = vld [vmem:[#allocation6 + $0x58] sm:$0xf]
    %v1019 = vld [vmem:[#allocation6 + $0x5c] sm:$0xf]
    %v1020 = vld [vmem:[#allocation6 + $0x60] sm:$0xf]
    %v1021 = vld [vmem:[#allocation6 + $0x64] sm:$0xf]
    %v1022 = vld [vmem:[#allocation6 + $0x68] sm:$0xf]
    %v1023 = vld [vmem:[#allocation6 + $0x6c] sm:$0xf]
    %v1024 = vld [vmem:[#allocation6 + $0x70] sm:$0xf]
    %v1025 = vld [vmem:[#allocation6 + $0x74] sm:$0xf]
    %v1026 = vld [vmem:[#allocation6 + $0x78] sm:$0xf]
    %v1027 = vld [vmem:[#allocation6 + $0x7c] sm:$0xf]
    %v1028 = vld [vmem:[#allocation6 + $0x80] sm:$0xf]
    %v1029 = vld [vmem:[#allocation6 + $0x84] sm:$0xf]
    %v1030 = vld [vmem:[#allocation6 + $0x88] sm:$0xf]
    %v1031 = vld [vmem:[#allocation6 + $0x8c] sm:$0xf]
    %v1032 = vld [vmem:[#allocation6 + $0x90] sm:$0xf]
    %v1033 = vld [vmem:[#allocation6 + $0x94] sm:$0xf]
    %v1034 = vld [vmem:[#allocation6 + $0x98] sm:$0xf]
    %v1035 = vld [vmem:[#allocation6 + $0x9c] sm:$0xf]
    %v1036 = vld [vmem:[#allocation6 + $0xa0] sm:$0xf]
    %v1037 = vld [vmem:[#allocation6 + $0xa4] sm:$0xf]
    %v1038 = vld [vmem:[#allocation6 + $0xa8] sm:$0xf]
    %v1039 = vld [vmem:[#allocation6 + $0xac] sm:$0xf]
    %v1040 = vld [vmem:[#allocation6 + $0xb0] sm:$0xf]
    %v1041 = vld [vmem:[#allocation6 + $0xb4] sm:$0xf]
    %v1042 = vld [vmem:[#allocation6 + $0xb8] sm:$0xf]
    %v1043 = vld [vmem:[#allocation6 + $0xbc] sm:$0xf]
    %v1044 = vld [vmem:[%s6] sm:$0x1]
    %v1046 = vperm.slane %v1044, 0
    %v1096 = vunpack.c.l.b16 %v996
    %v1097 = vunpack.c.l.b16 %v997
    %v1098 = vunpack.c.l.b16 %v998
    %v1099 = vunpack.c.l.b16 %v999
    %v1100 = vunpack.c.l.b16 %v1000
    %v1101 = vunpack.c.l.b16 %v1001
    %v1102 = vunpack.c.l.b16 %v1002
    %v1103 = vunpack.c.l.b16 %v1003
    %v1104 = vunpack.c.l.b16 %v1004
    %v1105 = vunpack.c.l.b16 %v1005
    %v1106 = vunpack.c.l.b16 %v1006
    %v1107 = vunpack.c.l.b16 %v1007
    %v1108 = vunpack.c.l.b16 %v1008
    %v1109 = vunpack.c.l.b16 %v1009
    %v1110 = vunpack.c.l.b16 %v1010
    %v1111 = vunpack.c.l.b16 %v1011
    %v1112 = vunpack.c.l.b16 %v1012
    %v1113 = vunpack.c.l.b16 %v1013
    %v1114 = vunpack.c.l.b16 %v1014
    %v1115 = vunpack.c.l.b16 %v1015
    %v1116 = vunpack.c.l.b16 %v1016
    %v1117 = vunpack.c.l.b16 %v1017
    %v1118 = vunpack.c.l.b16 %v1018
    %v1119 = vunpack.c.l.b16 %v1019
    %v1120 = vunpack.c.l.b16 %v1020
    %v1121 = vunpack.c.l.b16 %v1021
    %v1122 = vunpack.c.l.b16 %v1022
    %v1123 = vunpack.c.l.b16 %v1023
    %v1124 = vunpack.c.l.b16 %v1024
    %v1125 = vunpack.c.l.b16 %v1025
    %v1126 = vunpack.c.l.b16 %v1026
    %v1127 = vunpack.c.l.b16 %v1027
    %v1128 = vunpack.c.l.b16 %v1028
    %v1129 = vunpack.c.l.b16 %v1029
    %v1130 = vunpack.c.l.b16 %v1030
    %v1131 = vunpack.c.l.b16 %v1031
    %v1132 = vunpack.c.l.b16 %v1032
    %v1133 = vunpack.c.l.b16 %v1033
    %v1134 = vunpack.c.l.b16 %v1034
    %v1135 = vunpack.c.l.b16 %v1035
    %v1136 = vunpack.c.l.b16 %v1036
    %v1137 = vunpack.c.l.b16 %v1037
    %v1138 = vunpack.c.l.b16 %v1038
    %v1139 = vunpack.c.l.b16 %v1039
    %v1140 = vunpack.c.l.b16 %v1040
    %v1141 = vunpack.c.l.b16 %v1041
    %v1142 = vunpack.c.l.b16 %v1042
    %v1143 = vunpack.c.l.b16 %v1043
    %v1144 = vpack.c.b16 %v1097, %v1096
    %v1145 = vpack.c.b16 %v1099, %v1098
    %v1146 = vpack.c.b16 %v1101, %v1100
    %v1147 = vpack.c.b16 %v1103, %v1102
    %v1148 = vpack.c.b16 %v1105, %v1104
    %v1149 = vpack.c.b16 %v1107, %v1106
    %v1150 = vpack.c.b16 %v1109, %v1108
    %v1151 = vpack.c.b16 %v1111, %v1110
    %v1152 = vpack.c.b16 %v1113, %v1112
    %v1153 = vpack.c.b16 %v1115, %v1114
    %v1154 = vpack.c.b16 %v1117, %v1116
    %v1155 = vpack.c.b16 %v1119, %v1118
    %v1156 = vpack.c.b16 %v1121, %v1120
    %v1157 = vpack.c.b16 %v1123, %v1122
    %v1158 = vpack.c.b16 %v1125, %v1124
    %v1159 = vpack.c.b16 %v1127, %v1126
    %v1160 = vpack.c.b16 %v1129, %v1128
    %v1161 = vpack.c.b16 %v1131, %v1130
    %v1162 = vpack.c.b16 %v1133, %v1132
    %v1163 = vpack.c.b16 %v1135, %v1134
    %v1164 = vpack.c.b16 %v1137, %v1136
    %v1165 = vpack.c.b16 %v1139, %v1138
    %v1166 = vpack.c.b16 %v1141, %v1140
    %v1167 = vpack.c.b16 %v1143, %v1142
    %1192 = vmatpush.bf16.msra.mxu0 %v1151
    %1193 = vmatpush.bf16.msra.mxu0 %v1150
    %1194 = vmatpush.bf16.msra.mxu0 %v1149
    %1195 = vmatpush.bf16.msra.mxu0 %v1148
    %1196 = vmatpush.bf16.msra.mxu0 %v1147
    %1197 = vmatpush.bf16.msra.mxu0 %v1146
    %1198 = vmatpush.bf16.msra.mxu0 %v1145
    %1199 = vmatpush.bf16.msra.mxu0 %v1144
    %1200 = vmatmul.bf16.gmra.mxu0 %v993
    %v1201 = vpop.f32.mrf.mxu0
    %v1202 = vadd.f32 %v1046, %v1201
    %v1203 = vpop.f32.mrf.mxu0
    %1204 = vdwg.mxu0
    %1205 = vmatpush.bf16.msra.mxu0 %v1159
    %1206 = vmatpush.bf16.msra.mxu0 %v1158
    %1207 = vmatpush.bf16.msra.mxu0 %v1157
    %1208 = vmatpush.bf16.msra.mxu0 %v1156
    %1209 = vmatpush.bf16.msra.mxu0 %v1155
    %1210 = vmatpush.bf16.msra.mxu0 %v1154
    %1211 = vmatpush.bf16.msra.mxu0 %v1153
    %1212 = vmatpush.bf16.msra.mxu0 %v1152
    %1213 = vmatmul.bf16.gmra.mxu0 %v994
    %v1214 = vpop.f32.mrf.mxu0
    %v1215 = vadd.f32 %v1202, %v1214
    %v1216 = vpop.f32.mrf.mxu0
    %1217 = vdwg.mxu0
    %1218 = vmatpush.bf16.msra.mxu0 %v1167
    %1219 = vmatpush.bf16.msra.mxu0 %v1166
    %1220 = vmatpush.bf16.msra.mxu0 %v1165
    %1221 = vmatpush.bf16.msra.mxu0 %v1164
    %1222 = vmatpush.bf16.msra.mxu0 %v1163
    %1223 = vmatpush.bf16.msra.mxu0 %v1162
    %1224 = vmatpush.bf16.msra.mxu0 %v1161
    %1225 = vmatpush.bf16.msra.mxu0 %v1160
    %1226 = vmatmul.bf16.gmra.mxu0 %v995
    %v1227 = vpop.f32.mrf.mxu0
    %v1228 = vadd.f32 %v1215, %v1227
    %v1229 = vpop.f32.mrf.mxu0
    %1230 = vdwg.mxu0
    %v1231 = vtanh.pop %v1228
    %1232 = vst [vmem:[%s7] sm:$0xff] %v1231
    // Predicated region
    $region42: #{td3_actor_forward.1} parent=1 // pred_check
      _
    $region43: #{td3_actor_forward.1} parent=1 // pred_check_branch
      %1234 = sbr.rel (0) target = $region45
    $region44: #{td3_actor_forward.1} parent=1 // pred_region
      _
    $region45: #{td3_actor_forward.1} parent=1 // pred_fallthru
      _
    // Predicated region
    $region46: #{td3_actor_forward.1} parent=1 // pred_check
      _
    $region47: #{td3_actor_forward.1} parent=1 // pred_check_branch
      %1236 = sbr.rel (0) target = $region49
    $region48: #{td3_actor_forward.1} parent=1 // pred_region
      _
    $region49: #{td3_actor_forward.1} parent=1 // pred_fallthru
      _
    %1237 = vsyncpa [#allocation3], 1
    %1238 = vsyncpa [#allocation5], 1

</llo_original>
